<compile_context>
chip_gen: v6e
topology: v6e:2x2x1
jax: 0.10.0
libtpu: 0.0.40
codegen_flags: <defaults>
</compile_context>

<pallas_src>
import functools

import jax
import jax.numpy as jnp
from jax.experimental import pallas as pl
from jax.experimental.pallas import tpu as pltpu

_NUM_FEATS = 16     # rows: [cx, cy, w, h, ang, xmin, ymin, xmax, ymax, 0...]
_CHUNK = 128        # lane-chunk width inside the kernel (one f32 vreg wide)
_BIG = 1.0e8        # degenerate-AABB pad value -> padded entries never overlap anything


def _round_up(x, m):
    return (x + m - 1) // m * m


def _num_core_groups():
    """2 on chips with two TensorCores (v7x / megacore v4, v5p), 1 on v5e / v6e."""
    try:
        kind = jax.devices()[0].device_kind.lower().replace(" ", "")
    except Exception:
        return 1
    if "v7" in kind:
        return 2
    if "v4" in kind or "v5p" in kind:
        return 2
    return 1


def _aabb_from_rotbox(cx, cy, w, h, cs, ss):
    """RotBox2Polys_torch + poly2bbox_torch: axis-aligned bbox of the rotated box."""
    ww = (w - 1.0) * 0.5
    hh = (h - 1.0) * 0.5
    x1 = cx + cs * ww + ss * hh
    x2 = cx + cs * ww - ss * hh
    x3 = cx - cs * ww - ss * hh
    x4 = cx - cs * ww + ss * hh
    y1 = cy + ss * ww - cs * hh
    y2 = cy + ss * ww + cs * hh
    y3 = cy - ss * ww + cs * hh
    y4 = cy - ss * ww - cs * hh
    xmin = jnp.minimum(jnp.minimum(x1, x2), jnp.minimum(x3, x4))
    xmax = jnp.maximum(jnp.maximum(x1, x2), jnp.maximum(x3, x4))
    ymin = jnp.minimum(jnp.minimum(y1, y2), jnp.minimum(y3, y4))
    ymax = jnp.maximum(jnp.maximum(y1, y2), jnp.maximum(y3, y4))
    return xmin, ymin, xmax, ymax


def _augment(boxes):
    """(K, 5) rotated boxes -> (16, K) feature rows: params + AABB."""
    cx, cy, w, h, ang = (boxes[:, i] for i in range(5))
    cs, ss = jnp.cos(ang), jnp.sin(ang)
    xmin, ymin, xmax, ymax = _aabb_from_rotbox(cx, cy, w, h, cs, ss)
    feats = jnp.stack([cx, cy, w, h, ang, xmin, ymin, xmax, ymax], axis=0)
    return jnp.pad(feats, ((0, _NUM_FEATS - feats.shape[0]), (0, 0)))


def _pad_cols(feats, total):
    """Pad feature columns with degenerate AABBs so padded entries never overlap."""
    k = feats.shape[1]
    if total == k:
        return feats
    pad = jnp.zeros((_NUM_FEATS, total - k), feats.dtype)
    pad = pad.at[5].set(_BIG).at[6].set(_BIG).at[7].set(-_BIG).at[8].set(-_BIG)
    return jnp.concatenate([feats, pad], axis=1)


def _smooth_l1_polar_kernel(pred_ref, gt_ref, acc_ref, *, beta, tile_n, m_pad):
    t = pl.program_id(1)

    @pl.when(t == 0)
    def _init():
        acc_ref[...] = jnp.zeros_like(acc_ref)

    gt = gt_ref[...]                                            # (m_pad, 16)

    # Hoisted GT-side quantities: lane-broadcast once per grid step, reused by every chunk.
    g_param = [jnp.broadcast_to(gt[:, p:p + 1], (m_pad, _CHUNK)) for p in range(5)]
    g_xmin = jnp.broadcast_to(gt[:, 5:6], (m_pad, _CHUNK))
    g_ymin = jnp.broadcast_to(gt[:, 6:7], (m_pad, _CHUNK))
    g_xmax = jnp.broadcast_to(gt[:, 7:8], (m_pad, _CHUNK))
    g_ymax = jnp.broadcast_to(gt[:, 8:9], (m_pad, _CHUNK))
    area_g = jnp.broadcast_to(
        (gt[:, 7:8] - gt[:, 5:6] + 1.0) * (gt[:, 8:9] - gt[:, 6:7] + 1.0),
        (m_pad, _CHUNK))

    half_inv_beta = 0.5 / beta      # folded constants (no per-element divide by beta)
    half_beta = 0.5 * beta

    # Register-resident accumulators: one (m_pad, 128) slab per box parameter.
    acc = [jnp.zeros((m_pad, _CHUNK), jnp.float32) for _ in range(5)]

    # TODO(synk): for very large GT counts (m_pad >> 32) add an inner sublane-group loop
    # instead of full (m_pad, 128) pairwise tiles, to keep the kernel out of vreg spills.
    for c in range(tile_n // _CHUNK):
        start = c * _CHUNK                                      # static slice start

        def prow(r, _start=start):
            return pred_ref[r:r + 1, pl.ds(_start, _CHUNK)]     # (1, _CHUNK)

        # IoU weight for this chunk (mmdet 1.x bbox_overlaps with the +1 pixel offset).
        p_xmin = jnp.broadcast_to(prow(5), (m_pad, _CHUNK))
        p_ymin = jnp.broadcast_to(prow(6), (m_pad, _CHUNK))
        p_xmax = jnp.broadcast_to(prow(7), (m_pad, _CHUNK))
        p_ymax = jnp.broadcast_to(prow(8), (m_pad, _CHUNK))
        ow = jnp.maximum(
            jnp.minimum(p_xmax, g_xmax) - jnp.maximum(p_xmin, g_xmin) + 1.0, 0.0)
        oh = jnp.maximum(
            jnp.minimum(p_ymax, g_ymax) - jnp.maximum(p_ymin, g_ymin) + 1.0, 0.0)
        overlap = ow * oh                                       # (m_pad, _CHUNK)
        area_p = (p_xmax - p_xmin + 1.0) * (p_ymax - p_ymin + 1.0)
        union = area_p + area_g - overlap
        ious = overlap / union                                  # exact division (EUP slack)
        valid = overlap > 0.0                                   # padded boxes never overlap
        weight = jnp.where(valid, -jnp.log(jnp.where(valid, ious, 1.0)), 0.0)

        # Single-pass smooth-L1 over the 5 box parameters.
        l1 = []
        sum_sq = None
        for p in range(5):
            diff = jnp.abs(g_param[p] - prow(p))
            lp = jnp.where(diff < beta, half_inv_beta * diff * diff, diff - half_beta)
            l1.append(lp)
            sum_sq = lp * lp if sum_sq is None else sum_sq + lp * lp

        # Fold -log(iou) * 1/||l1||_2 into one factor; ||l1|| == 0 pairs contribute 0
        # (the PyTorch reference would produce NaN from 0/0 there).
        wf = jnp.where(sum_sq > 0.0, weight * jax.lax.rsqrt(sum_sq), 0.0)
        for p in range(5):
            acc[p] = acc[p] + l1[p] * wf

    # One tiny read-modify-write of the resident output block per grid step.
    for p in range(5):
        acc_ref[p] += acc[p]


def smooth_l1_loss_pallas(pred, target, beta=1.0, loss_weight=1.0, tile_n=None):
    assert beta > 0
    pred = jnp.asarray(pred, jnp.float32)        # (N, 5) rotated boxes
    target = jnp.asarray(target, jnp.float32)    # (M, 5) rotated boxes
    n, m = int(pred.shape[0]), int(target.shape[0])

    groups = _num_core_groups()

    # Adaptive tile size: multiple of 128, <= 4096, aiming for ~4 tiles per core group.
    if tile_n is None:
        tile_n = _round_up(-(-max(n, 1) // (groups * 4)), _CHUNK)
        tile_n = int(min(max(tile_n, _CHUNK), 4096))
    else:
        tile_n = int(max(_CHUNK, _round_up(int(tile_n), _CHUNK)))

    n_pad = _round_up(max(n, 1), groups * tile_n)
    m_pad = _round_up(max(m, 1), 8)
    tiles_per_group = n_pad // (groups * tile_n)

    pred_aug = _pad_cols(_augment(pred), n_pad)          # (16, N_pad)  pred on lanes
    gt_aug = _pad_cols(_augment(target), m_pad).T        # (M_pad, 16)  gt on sublanes

    kernel = functools.partial(_smooth_l1_polar_kernel, beta=float(beta),
                               tile_n=tile_n, m_pad=m_pad)
    acc = pl.pallas_call(
        kernel,
        out_shape=jax.ShapeDtypeStruct((groups * 5, m_pad, _CHUNK), jnp.float32),
        grid_spec=pltpu.PrefetchScalarGridSpec(
            num_scalar_prefetch=0,
            grid=(groups, tiles_per_group),
            in_specs=[
                pl.BlockSpec((_NUM_FEATS, tile_n),
                             lambda c, t: (0, c * tiles_per_group + t)),
                pl.BlockSpec((m_pad, _NUM_FEATS), lambda c, t: (0, 0)),
            ],
            out_specs=pl.BlockSpec((5, m_pad, _CHUNK), lambda c, t: (c, 0, 0)),
        ),
        compiler_params=pltpu.CompilerParams(
            dimension_semantics=("parallel", "arbitrary")),
    )(pred_aug, gt_aug)

    # Trivial finalize in the wrapper: reduce the tiny per-core-group accumulators.
    partial = acc.reshape(groups, 5, m_pad, _CHUNK).sum(axis=(0, 2, 3))
    return loss_weight * partial


class SmoothL1Loss:
    """Pallas-TPU port of the PolarMask SmoothL1Loss module (no learnable params)."""

    def __init__(self, beta=1.0, reduction='mean', loss_weight=1.0, tile_n=None):
        self.beta = beta
        self.reduction = reduction      # unused by the original forward as well
        self.loss_weight = loss_weight
        self.tile_n = tile_n

    def __call__(self, pred, target, weight=None, avg_factor=None,
                 reduction_override=None, **kwargs):
        assert reduction_override in (None, 'none', 'mean', 'sum')
        return smooth_l1_loss_pallas(pred, target, beta=self.beta,
                                     loss_weight=self.loss_weight, tile_n=self.tile_n)


def _smooth_l1_loss_ref(pred, gt, beta=1.0, loss_weight=1.0):
    """Pure-JAX reference (mirrors the PyTorch code) for validation."""
    def aabb(b):
        cx, cy, w, h, a = (b[:, i] for i in range(5))
        cs, ss = jnp.cos(a), jnp.sin(a)
        ww, hh = (w - 1.0) * 0.5, (h - 1.0) * 0.5
        xs = jnp.stack([cx + cs * ww + ss * hh, cx + cs * ww - ss * hh,
                        cx - cs * ww - ss * hh, cx - cs * ww + ss * hh], 1)
        ys = jnp.stack([cy + ss * ww - cs * hh, cy + ss * ww + cs * hh,
                        cy - ss * ww + cs * hh, cy - ss * ww - cs * hh], 1)
        return jnp.stack([xs.min(1), ys.min(1), xs.max(1), ys.max(1)], 1)

    hp, hg = aabb(pred), aabb(gt)
    lt = jnp.maximum(hp[:, None, :2], hg[None, :, :2])
    rb = jnp.minimum(hp[:, None, 2:], hg[None, :, 2:])
    wh = jnp.maximum(rb - lt + 1.0, 0.0)
    ov = wh[..., 0] * wh[..., 1]
    a1 = (hp[:, 2] - hp[:, 0] + 1.0) * (hp[:, 3] - hp[:, 1] + 1.0)
    a2 = (hg[:, 2] - hg[:, 0] + 1.0) * (hg[:, 3] - hg[:, 1] + 1.0)
    ious = ov / (a1[:, None] + a2[None, :] - ov)
    w = jnp.where(ious > 0.0, -jnp.log(jnp.where(ious > 0.0, ious, 1.0)), 0.0)
    diff = jnp.abs(gt[None, :, :] - pred[:, None, :])
    l1 = jnp.where(diff < beta, 0.5 * diff * diff / beta, diff - 0.5 * beta)
    l1 = l1 / jnp.sqrt(jnp.sum(l1 * l1, -1, keepdims=True))
    return loss_weight * jnp.sum(l1 * w[..., None], axis=(0, 1))


if __name__ == "__main__":
    key = jax.random.PRNGKey(0)
    kp, kg = jax.random.split(key)

    def make_boxes(k, n):
        kc, ks, ka = jax.random.split(k, 3)
        ctr = jax.random.uniform(kc, (n, 2), minval=10.0, maxval=90.0)
        wh = jax.random.uniform(ks, (n, 2), minval=12.0, maxval=48.0)
        ang = jax.random.uniform(ka, (n, 1), minval=-0.6, maxval=0.6)
        return jnp.concatenate([ctr, wh, ang], axis=1).astype(jnp.float32)

    pred = make_boxes(kp, 100)    # (N=100, 5) rotated boxes (exercises N padding)
    target = make_boxes(kg, 7)    # (M=7, 5) rotated boxes (exercises M padding to 8)

    loss_mod = SmoothL1Loss(beta=1.0, reduction='mean', loss_weight=1.0)
    out = jax.block_until_ready(loss_mod(pred, target))

    ref = _smooth_l1_loss_ref(pred, target, beta=1.0, loss_weight=1.0)
    assert out.shape == (5,)
    assert jnp.allclose(out, ref, rtol=5e-3, atol=5e-3), (out, ref)
    print("KERNEL_OK")
</pallas_src>

<mosaic_0001>
module attributes {stable_mosaic.version = 11 : i64} {
  func.func @_smooth_l1_polar_kernel(%arg0: i32, %arg1: i32, %arg2: memref<16x128xf32, #tpu.memory_space<vmem>>, %arg3: memref<8x16xf32, #tpu.memory_space<vmem>>, %arg4: memref<5x8x128xf32, #tpu.memory_space<vmem>>) attributes {dimension_semantics = [#tpu.dimension_semantics<parallel>, #tpu.dimension_semantics<arbitrary>], iteration_bounds = array<i64: 1, 1>, scalar_prefetch = 0 : i64, scratch_operands = 0 : i64, tpu.core_type = #tpu.core_type<tc>, window_params = [{transform_indices = @transform_0, window_bounds = array<i64: 16, 128>}, {pipeline_mode = #tpu.pipeline_mode<synchronous>, transform_indices = @transform_1, window_bounds = array<i64: 8, 16>}, {transform_indices = @transform_2, window_bounds = array<i64: 5, 8, 128>}]} {
    %c0_i32 = arith.constant 0 : i32
    %0 = arith.cmpi eq, %arg1, %c0_i32 : i32
    %1 = arith.extui %0 : i1 to i32
    %c0_i32_0 = arith.constant 0 : i32
    %2 = arith.cmpi ne, %1, %c0_i32_0 : i32
    scf.if %2 {
      %cst_75 = arith.constant 0.000000e+00 : f32
      %210 = vector.broadcast %cst_75 : f32 to vector<5x8x128xf32>
      %c0_76 = arith.constant 0 : index
      %c0_77 = arith.constant 0 : index
      %c0_78 = arith.constant 0 : index
      %211 = vector.load %arg4[%c0_76, %c0_77, %c0_78] : memref<5x8x128xf32, #tpu.memory_space<vmem>>, vector<5x8x128xf32>
      tpu.vector_store %arg4[%c0_76, %c0_77, %c0_78], %210 {strides = array<i32>} : memref<5x8x128xf32, #tpu.memory_space<vmem>>, vector<5x8x128xf32>,
    } else {
    }
    %c0 = arith.constant 0 : index
    %c0_1 = arith.constant 0 : index
    %3 = vector.load %arg3[%c0, %c0_1] : memref<8x16xf32, #tpu.memory_space<vmem>>, vector<8x16xf32>
    %4 = vector.extract_strided_slice %3 {offsets = [0, 0], sizes = [8, 1], strides = [1, 1]} : vector<8x16xf32> to vector<8x1xf32>
    %5 = vector.shape_cast %4 : vector<8x1xf32> to vector<8x1xf32>
    %6 = vector.broadcast %5 : vector<8x1xf32> to vector<8x128xf32>
    %7 = vector.extract_strided_slice %3 {offsets = [0, 1], sizes = [8, 1], strides = [1, 1]} : vector<8x16xf32> to vector<8x1xf32>
    %8 = vector.shape_cast %7 : vector<8x1xf32> to vector<8x1xf32>
    %9 = vector.broadcast %8 : vector<8x1xf32> to vector<8x128xf32>
    %10 = vector.extract_strided_slice %3 {offsets = [0, 2], sizes = [8, 1], strides = [1, 1]} : vector<8x16xf32> to vector<8x1xf32>
    %11 = vector.shape_cast %10 : vector<8x1xf32> to vector<8x1xf32>
    %12 = vector.broadcast %11 : vector<8x1xf32> to vector<8x128xf32>
    %13 = vector.extract_strided_slice %3 {offsets = [0, 3], sizes = [8, 1], strides = [1, 1]} : vector<8x16xf32> to vector<8x1xf32>
    %14 = vector.shape_cast %13 : vector<8x1xf32> to vector<8x1xf32>
    %15 = vector.broadcast %14 : vector<8x1xf32> to vector<8x128xf32>
    %16 = vector.extract_strided_slice %3 {offsets = [0, 4], sizes = [8, 1], strides = [1, 1]} : vector<8x16xf32> to vector<8x1xf32>
    %17 = vector.shape_cast %16 : vector<8x1xf32> to vector<8x1xf32>
    %18 = vector.broadcast %17 : vector<8x1xf32> to vector<8x128xf32>
    %19 = vector.extract_strided_slice %3 {offsets = [0, 5], sizes = [8, 1], strides = [1, 1]} : vector<8x16xf32> to vector<8x1xf32>
    %20 = vector.shape_cast %19 : vector<8x1xf32> to vector<8x1xf32>
    %21 = vector.broadcast %20 : vector<8x1xf32> to vector<8x128xf32>
    %22 = vector.extract_strided_slice %3 {offsets = [0, 6], sizes = [8, 1], strides = [1, 1]} : vector<8x16xf32> to vector<8x1xf32>
    %23 = vector.shape_cast %22 : vector<8x1xf32> to vector<8x1xf32>
    %24 = vector.broadcast %23 : vector<8x1xf32> to vector<8x128xf32>
    %25 = vector.extract_strided_slice %3 {offsets = [0, 7], sizes = [8, 1], strides = [1, 1]} : vector<8x16xf32> to vector<8x1xf32>
    %26 = vector.shape_cast %25 : vector<8x1xf32> to vector<8x1xf32>
    %27 = vector.broadcast %26 : vector<8x1xf32> to vector<8x128xf32>
    %28 = vector.extract_strided_slice %3 {offsets = [0, 8], sizes = [8, 1], strides = [1, 1]} : vector<8x16xf32> to vector<8x1xf32>
    %29 = vector.shape_cast %28 : vector<8x1xf32> to vector<8x1xf32>
    %30 = vector.broadcast %29 : vector<8x1xf32> to vector<8x128xf32>
    %31 = vector.extract_strided_slice %3 {offsets = [0, 7], sizes = [8, 1], strides = [1, 1]} : vector<8x16xf32> to vector<8x1xf32>
    %32 = vector.extract_strided_slice %3 {offsets = [0, 5], sizes = [8, 1], strides = [1, 1]} : vector<8x16xf32> to vector<8x1xf32>
    %33 = arith.subf %31, %32 : vector<8x1xf32>
    %cst = arith.constant 1.000000e+00 : f32
    %34 = vector.broadcast %cst : f32 to vector<8x1xf32>
    %35 = arith.addf %33, %34 : vector<8x1xf32>
    %36 = vector.extract_strided_slice %3 {offsets = [0, 8], sizes = [8, 1], strides = [1, 1]} : vector<8x16xf32> to vector<8x1xf32>
    %37 = vector.extract_strided_slice %3 {offsets = [0, 6], sizes = [8, 1], strides = [1, 1]} : vector<8x16xf32> to vector<8x1xf32>
    %38 = arith.subf %36, %37 : vector<8x1xf32>
    %cst_2 = arith.constant 1.000000e+00 : f32
    %39 = vector.broadcast %cst_2 : f32 to vector<8x1xf32>
    %40 = arith.addf %38, %39 : vector<8x1xf32>
    %41 = arith.mulf %35, %40 : vector<8x1xf32>
    %42 = vector.shape_cast %41 : vector<8x1xf32> to vector<8x1xf32>
    %43 = vector.broadcast %42 : vector<8x1xf32> to vector<8x128xf32>
    %cst_3 = arith.constant 0.000000e+00 : f32
    %44 = vector.broadcast %cst_3 : f32 to vector<8x128xf32>
    %cst_4 = arith.constant 0.000000e+00 : f32
    %45 = vector.broadcast %cst_4 : f32 to vector<8x128xf32>
    %cst_5 = arith.constant 0.000000e+00 : f32
    %46 = vector.broadcast %cst_5 : f32 to vector<8x128xf32>
    %cst_6 = arith.constant 0.000000e+00 : f32
    %47 = vector.broadcast %cst_6 : f32 to vector<8x128xf32>
    %cst_7 = arith.constant 0.000000e+00 : f32
    %48 = vector.broadcast %cst_7 : f32 to vector<8x128xf32>
    %c5 = arith.constant 5 : index
    %c0_8 = arith.constant 0 : index
    %49 = vector.load %arg2[%c5, %c0_8] : memref<16x128xf32, #tpu.memory_space<vmem>>, vector<1x128xf32>
    %50 = vector.shape_cast %49 : vector<1x128xf32> to vector<1x128xf32>
    %51 = vector.broadcast %50 : vector<1x128xf32> to vector<8x128xf32>
    %c6 = arith.constant 6 : index
    %c0_9 = arith.constant 0 : index
    %52 = vector.load %arg2[%c6, %c0_9] : memref<16x128xf32, #tpu.memory_space<vmem>>, vector<1x128xf32>
    %53 = vector.shape_cast %52 : vector<1x128xf32> to vector<1x128xf32>
    %54 = vector.broadcast %53 : vector<1x128xf32> to vector<8x128xf32>
    %c7 = arith.constant 7 : index
    %c0_10 = arith.constant 0 : index
    %55 = vector.load %arg2[%c7, %c0_10] : memref<16x128xf32, #tpu.memory_space<vmem>>, vector<1x128xf32>
    %56 = vector.shape_cast %55 : vector<1x128xf32> to vector<1x128xf32>
    %57 = vector.broadcast %56 : vector<1x128xf32> to vector<8x128xf32>
    %c8 = arith.constant 8 : index
    %c0_11 = arith.constant 0 : index
    %58 = vector.load %arg2[%c8, %c0_11] : memref<16x128xf32, #tpu.memory_space<vmem>>, vector<1x128xf32>
    %59 = vector.shape_cast %58 : vector<1x128xf32> to vector<1x128xf32>
    %60 = vector.broadcast %59 : vector<1x128xf32> to vector<8x128xf32>
    %61 = arith.minimumf %57, %27 : vector<8x128xf32>
    %62 = arith.maximumf %51, %21 : vector<8x128xf32>
    %63 = arith.subf %61, %62 : vector<8x128xf32>
    %cst_12 = arith.constant 1.000000e+00 : f32
    %64 = vector.broadcast %cst_12 : f32 to vector<8x128xf32>
    %65 = arith.addf %63, %64 : vector<8x128xf32>
    %cst_13 = arith.constant 0.000000e+00 : f32
    %66 = vector.broadcast %cst_13 : f32 to vector<8x128xf32>
    %67 = arith.maximumf %65, %66 : vector<8x128xf32>
    %68 = arith.minimumf %60, %30 : vector<8x128xf32>
    %69 = arith.maximumf %54, %24 : vector<8x128xf32>
    %70 = arith.subf %68, %69 : vector<8x128xf32>
    %cst_14 = arith.constant 1.000000e+00 : f32
    %71 = vector.broadcast %cst_14 : f32 to vector<8x128xf32>
    %72 = arith.addf %70, %71 : vector<8x128xf32>
    %cst_15 = arith.constant 0.000000e+00 : f32
    %73 = vector.broadcast %cst_15 : f32 to vector<8x128xf32>
    %74 = arith.maximumf %72, %73 : vector<8x128xf32>
    %75 = arith.mulf %67, %74 : vector<8x128xf32>
    %76 = arith.subf %57, %51 : vector<8x128xf32>
    %cst_16 = arith.constant 1.000000e+00 : f32
    %77 = vector.broadcast %cst_16 : f32 to vector<8x128xf32>
    %78 = arith.addf %76, %77 : vector<8x128xf32>
    %79 = arith.subf %60, %54 : vector<8x128xf32>
    %cst_17 = arith.constant 1.000000e+00 : f32
    %80 = vector.broadcast %cst_17 : f32 to vector<8x128xf32>
    %81 = arith.addf %79, %80 : vector<8x128xf32>
    %82 = arith.mulf %78, %81 : vector<8x128xf32>
    %83 = arith.addf %82, %43 : vector<8x128xf32>
    %84 = arith.subf %83, %75 : vector<8x128xf32>
    %85 = arith.divf %75, %84 : vector<8x128xf32>
    %cst_18 = arith.constant 0.000000e+00 : f32
    %86 = vector.broadcast %cst_18 : f32 to vector<8x128xf32>
    %87 = arith.cmpf ogt, %75, %86 : vector<8x128xf32>
    %cst_19 = arith.constant 1.000000e+00 : f32
    %88 = vector.broadcast %cst_19 : f32 to vector<8x128xf32>
    %89 = arith.select %87, %85, %88 : vector<8x128xi1>, vector<8x128xf32>
    %90 = math.log %89 : vector<8x128xf32>
    %cst_20 = arith.constant 0.000000e+00 : f32
    %91 = vector.broadcast %cst_20 : f32 to vector<8x128xf32>
    %92 = arith.subf %91, %90 : vector<8x128xf32>
    %cst_21 = arith.constant 0.000000e+00 : f32
    %93 = vector.broadcast %cst_21 : f32 to vector<8x128xf32>
    %94 = arith.select %87, %92, %93 : vector<8x128xi1>, vector<8x128xf32>
    %c0_22 = arith.constant 0 : index
    %c0_23 = arith.constant 0 : index
    %95 = vector.load %arg2[%c0_22, %c0_23] : memref<16x128xf32, #tpu.memory_space<vmem>>, vector<1x128xf32>
    %96 = vector.broadcast %95 : vector<1x128xf32> to vector<8x128xf32>
    %97 = arith.subf %6, %96 : vector<8x128xf32>
    %98 = math.absf %97 : vector<8x128xf32>
    %cst_24 = arith.constant 1.000000e+00 : f32
    %99 = vector.broadcast %cst_24 : f32 to vector<8x128xf32>
    %100 = arith.cmpf olt, %98, %99 : vector<8x128xf32>
    %cst_25 = arith.constant 5.000000e-01 : f32
    %101 = vector.broadcast %cst_25 : f32 to vector<8x128xf32>
    %102 = arith.mulf %101, %98 : vector<8x128xf32>
    %103 = arith.mulf %102, %98 : vector<8x128xf32>
    %cst_26 = arith.constant 5.000000e-01 : f32
    %104 = vector.broadcast %cst_26 : f32 to vector<8x128xf32>
    %105 = arith.subf %98, %104 : vector<8x128xf32>
    %106 = arith.select %100, %103, %105 : vector<8x128xi1>, vector<8x128xf32>
    %107 = arith.mulf %106, %106 : vector<8x128xf32>
    %c1 = arith.constant 1 : index
    %c0_27 = arith.constant 0 : index
    %108 = vector.load %arg2[%c1, %c0_27] : memref<16x128xf32, #tpu.memory_space<vmem>>, vector<1x128xf32>
    %109 = vector.broadcast %108 : vector<1x128xf32> to vector<8x128xf32>
    %110 = arith.subf %9, %109 : vector<8x128xf32>
    %111 = math.absf %110 : vector<8x128xf32>
    %cst_28 = arith.constant 1.000000e+00 : f32
    %112 = vector.broadcast %cst_28 : f32 to vector<8x128xf32>
    %113 = arith.cmpf olt, %111, %112 : vector<8x128xf32>
    %cst_29 = arith.constant 5.000000e-01 : f32
    %114 = vector.broadcast %cst_29 : f32 to vector<8x128xf32>
    %115 = arith.mulf %114, %111 : vector<8x128xf32>
    %116 = arith.mulf %115, %111 : vector<8x128xf32>
    %cst_30 = arith.constant 5.000000e-01 : f32
    %117 = vector.broadcast %cst_30 : f32 to vector<8x128xf32>
    %118 = arith.subf %111, %117 : vector<8x128xf32>
    %119 = arith.select %113, %116, %118 : vector<8x128xi1>, vector<8x128xf32>
    %120 = arith.mulf %119, %119 : vector<8x128xf32>
    %121 = arith.addf %107, %120 : vector<8x128xf32>
    %c2 = arith.constant 2 : index
    %c0_31 = arith.constant 0 : index
    %122 = vector.load %arg2[%c2, %c0_31] : memref<16x128xf32, #tpu.memory_space<vmem>>, vector<1x128xf32>
    %123 = vector.broadcast %122 : vector<1x128xf32> to vector<8x128xf32>
    %124 = arith.subf %12, %123 : vector<8x128xf32>
    %125 = math.absf %124 : vector<8x128xf32>
    %cst_32 = arith.constant 1.000000e+00 : f32
    %126 = vector.broadcast %cst_32 : f32 to vector<8x128xf32>
    %127 = arith.cmpf olt, %125, %126 : vector<8x128xf32>
    %cst_33 = arith.constant 5.000000e-01 : f32
    %128 = vector.broadcast %cst_33 : f32 to vector<8x128xf32>
    %129 = arith.mulf %128, %125 : vector<8x128xf32>
    %130 = arith.mulf %129, %125 : vector<8x128xf32>
    %cst_34 = arith.constant 5.000000e-01 : f32
    %131 = vector.broadcast %cst_34 : f32 to vector<8x128xf32>
    %132 = arith.subf %125, %131 : vector<8x128xf32>
    %133 = arith.select %127, %130, %132 : vector<8x128xi1>, vector<8x128xf32>
    %134 = arith.mulf %133, %133 : vector<8x128xf32>
    %135 = arith.addf %121, %134 : vector<8x128xf32>
    %c3 = arith.constant 3 : index
    %c0_35 = arith.constant 0 : index
    %136 = vector.load %arg2[%c3, %c0_35] : memref<16x128xf32, #tpu.memory_space<vmem>>, vector<1x128xf32>
    %137 = vector.broadcast %136 : vector<1x128xf32> to vector<8x128xf32>
    %138 = arith.subf %15, %137 : vector<8x128xf32>
    %139 = math.absf %138 : vector<8x128xf32>
    %cst_36 = arith.constant 1.000000e+00 : f32
    %140 = vector.broadcast %cst_36 : f32 to vector<8x128xf32>
    %141 = arith.cmpf olt, %139, %140 : vector<8x128xf32>
    %cst_37 = arith.constant 5.000000e-01 : f32
    %142 = vector.broadcast %cst_37 : f32 to vector<8x128xf32>
    %143 = arith.mulf %142, %139 : vector<8x128xf32>
    %144 = arith.mulf %143, %139 : vector<8x128xf32>
    %cst_38 = arith.constant 5.000000e-01 : f32
    %145 = vector.broadcast %cst_38 : f32 to vector<8x128xf32>
    %146 = arith.subf %139, %145 : vector<8x128xf32>
    %147 = arith.select %141, %144, %146 : vector<8x128xi1>, vector<8x128xf32>
    %148 = arith.mulf %147, %147 : vector<8x128xf32>
    %149 = arith.addf %135, %148 : vector<8x128xf32>
    %c4 = arith.constant 4 : index
    %c0_39 = arith.constant 0 : index
    %150 = vector.load %arg2[%c4, %c0_39] : memref<16x128xf32, #tpu.memory_space<vmem>>, vector<1x128xf32>
    %151 = vector.broadcast %150 : vector<1x128xf32> to vector<8x128xf32>
    %152 = arith.subf %18, %151 : vector<8x128xf32>
    %153 = math.absf %152 : vector<8x128xf32>
    %cst_40 = arith.constant 1.000000e+00 : f32
    %154 = vector.broadcast %cst_40 : f32 to vector<8x128xf32>
    %155 = arith.cmpf olt, %153, %154 : vector<8x128xf32>
    %cst_41 = arith.constant 5.000000e-01 : f32
    %156 = vector.broadcast %cst_41 : f32 to vector<8x128xf32>
    %157 = arith.mulf %156, %153 : vector<8x128xf32>
    %158 = arith.mulf %157, %153 : vector<8x128xf32>
    %cst_42 = arith.constant 5.000000e-01 : f32
    %159 = vector.broadcast %cst_42 : f32 to vector<8x128xf32>
    %160 = arith.subf %153, %159 : vector<8x128xf32>
    %161 = arith.select %155, %158, %160 : vector<8x128xi1>, vector<8x128xf32>
    %162 = arith.mulf %161, %161 : vector<8x128xf32>
    %163 = arith.addf %149, %162 : vector<8x128xf32>
    %cst_43 = arith.constant 0.000000e+00 : f32
    %164 = vector.broadcast %cst_43 : f32 to vector<8x128xf32>
    %165 = arith.cmpf ogt, %163, %164 : vector<8x128xf32>
    %166 = math.rsqrt %163 : vector<8x128xf32>
    %167 = arith.mulf %94, %166 : vector<8x128xf32>
    %cst_44 = arith.constant 0.000000e+00 : f32
    %168 = vector.broadcast %cst_44 : f32 to vector<8x128xf32>
    %169 = arith.select %165, %167, %168 : vector<8x128xi1>, vector<8x128xf32>
    %170 = arith.mulf %106, %169 : vector<8x128xf32>
    %171 = arith.addf %44, %170 : vector<8x128xf32>
    %172 = arith.mulf %119, %169 : vector<8x128xf32>
    %173 = arith.addf %45, %172 : vector<8x128xf32>
    %174 = arith.mulf %133, %169 : vector<8x128xf32>
    %175 = arith.addf %46, %174 : vector<8x128xf32>
    %176 = arith.mulf %147, %169 : vector<8x128xf32>
    %177 = arith.addf %47, %176 : vector<8x128xf32>
    %178 = arith.mulf %161, %169 : vector<8x128xf32>
    %179 = arith.addf %48, %178 : vector<8x128xf32>
    %c0_45 = arith.constant 0 : index
    %c0_46 = arith.constant 0 : index
    %c0_47 = arith.constant 0 : index
    %180 = vector.load %arg4[%c0_45, %c0_46, %c0_47] : memref<5x8x128xf32, #tpu.memory_space<vmem>>, vector<1x8x128xf32>
    %181 = vector.shape_cast %180 : vector<1x8x128xf32> to vector<8x128xf32>
    %182 = arith.addf %181, %171 : vector<8x128xf32>
    %c0_48 = arith.constant 0 : index
    %c0_49 = arith.constant 0 : index
    %c0_50 = arith.constant 0 : index
    %183 = vector.load %arg4[%c0_48, %c0_49, %c0_50] : memref<5x8x128xf32, #tpu.memory_space<vmem>>, vector<1x8x128xf32>
    %184 = vector.shape_cast %183 : vector<1x8x128xf32> to vector<8x128xf32>
    %185 = vector.shape_cast %182 : vector<8x128xf32> to vector<1x8x128xf32>
    tpu.vector_store %arg4[%c0_48, %c0_49, %c0_50], %185 {strides = array<i32>} : memref<5x8x128xf32, #tpu.memory_space<vmem>>, vector<1x8x128xf32>,
    %c1_51 = arith.constant 1 : index
    %c0_52 = arith.constant 0 : index
    %c0_53 = arith.constant 0 : index
    %186 = vector.load %arg4[%c1_51, %c0_52, %c0_53] : memref<5x8x128xf32, #tpu.memory_space<vmem>>, vector<1x8x128xf32>
    %187 = vector.shape_cast %186 : vector<1x8x128xf32> to vector<8x128xf32>
    %188 = arith.addf %187, %173 : vector<8x128xf32>
    %c1_54 = arith.constant 1 : index
    %c0_55 = arith.constant 0 : index
    %c0_56 = arith.constant 0 : index
    %189 = vector.load %arg4[%c1_54, %c0_55, %c0_56] : memref<5x8x128xf32, #tpu.memory_space<vmem>>, vector<1x8x128xf32>
    %190 = vector.shape_cast %189 : vector<1x8x128xf32> to vector<8x128xf32>
    %191 = vector.shape_cast %188 : vector<8x128xf32> to vector<1x8x128xf32>
    tpu.vector_store %arg4[%c1_54, %c0_55, %c0_56], %191 {strides = array<i32>} : memref<5x8x128xf32, #tpu.memory_space<vmem>>, vector<1x8x128xf32>,
    %c2_57 = arith.constant 2 : index
    %c0_58 = arith.constant 0 : index
    %c0_59 = arith.constant 0 : index
    %192 = vector.load %arg4[%c2_57, %c0_58, %c0_59] : memref<5x8x128xf32, #tpu.memory_space<vmem>>, vector<1x8x128xf32>
    %193 = vector.shape_cast %192 : vector<1x8x128xf32> to vector<8x128xf32>
    %194 = arith.addf %193, %175 : vector<8x128xf32>
    %c2_60 = arith.constant 2 : index
    %c0_61 = arith.constant 0 : index
    %c0_62 = arith.constant 0 : index
    %195 = vector.load %arg4[%c2_60, %c0_61, %c0_62] : memref<5x8x128xf32, #tpu.memory_space<vmem>>, vector<1x8x128xf32>
    %196 = vector.shape_cast %195 : vector<1x8x128xf32> to vector<8x128xf32>
    %197 = vector.shape_cast %194 : vector<8x128xf32> to vector<1x8x128xf32>
    tpu.vector_store %arg4[%c2_60, %c0_61, %c0_62], %197 {strides = array<i32>} : memref<5x8x128xf32, #tpu.memory_space<vmem>>, vector<1x8x128xf32>,
    %c3_63 = arith.constant 3 : index
    %c0_64 = arith.constant 0 : index
    %c0_65 = arith.constant 0 : index
    %198 = vector.load %arg4[%c3_63, %c0_64, %c0_65] : memref<5x8x128xf32, #tpu.memory_space<vmem>>, vector<1x8x128xf32>
    %199 = vector.shape_cast %198 : vector<1x8x128xf32> to vector<8x128xf32>
    %200 = arith.addf %199, %177 : vector<8x128xf32>
    %c3_66 = arith.constant 3 : index
    %c0_67 = arith.constant 0 : index
    %c0_68 = arith.constant 0 : index
    %201 = vector.load %arg4[%c3_66, %c0_67, %c0_68] : memref<5x8x128xf32, #tpu.memory_space<vmem>>, vector<1x8x128xf32>
    %202 = vector.shape_cast %201 : vector<1x8x128xf32> to vector<8x128xf32>
    %203 = vector.shape_cast %200 : vector<8x128xf32> to vector<1x8x128xf32>
    tpu.vector_store %arg4[%c3_66, %c0_67, %c0_68], %203 {strides = array<i32>} : memref<5x8x128xf32, #tpu.memory_space<vmem>>, vector<1x8x128xf32>,
    %c4_69 = arith.constant 4 : index
    %c0_70 = arith.constant 0 : index
    %c0_71 = arith.constant 0 : index
    %204 = vector.load %arg4[%c4_69, %c0_70, %c0_71] : memref<5x8x128xf32, #tpu.memory_space<vmem>>, vector<1x8x128xf32>
    %205 = vector.shape_cast %204 : vector<1x8x128xf32> to vector<8x128xf32>
    %206 = arith.addf %205, %179 : vector<8x128xf32>
    %c4_72 = arith.constant 4 : index
    %c0_73 = arith.constant 0 : index
    %c0_74 = arith.constant 0 : index
    %207 = vector.load %arg4[%c4_72, %c0_73, %c0_74] : memref<5x8x128xf32, #tpu.memory_space<vmem>>, vector<1x8x128xf32>
    %208 = vector.shape_cast %207 : vector<1x8x128xf32> to vector<8x128xf32>
    %209 = vector.shape_cast %206 : vector<8x128xf32> to vector<1x8x128xf32>
    tpu.vector_store %arg4[%c4_72, %c0_73, %c0_74], %209 {strides = array<i32>} : memref<5x8x128xf32, #tpu.memory_space<vmem>>, vector<1x8x128xf32>,
    return
  }
  func.func @transform_0(%arg0: i32, %arg1: i32) -> (i32, i32) {
    %c1_i32 = arith.constant 1 : i32
    %0 = arith.muli %arg0, %c1_i32 : i32
    %1 = arith.addi %0, %arg1 : i32
    %c0_i32 = arith.constant 0 : i32
    %c0_i32_0 = arith.constant 0 : i32
    return %c0_i32, %1 : i32, i32
  }
  func.func @transform_1(%arg0: i32, %arg1: i32) -> (i32, i32) {
    %c0_i32 = arith.constant 0 : i32
    %c0_i32_0 = arith.constant 0 : i32
    %c0_i32_1 = arith.constant 0 : i32
    return %c0_i32, %c0_i32_0 : i32, i32
  }
  func.func @transform_2(%arg0: i32, %arg1: i32) -> (i32, i32, i32) {
    %c0_i32 = arith.constant 0 : i32
    %c0_i32_0 = arith.constant 0 : i32
    %c0_i32_1 = arith.constant 0 : i32
    return %arg0, %c0_i32, %c0_i32_0 : i32, i32, i32
  }
}

</mosaic_0001>

<llo_original>
// kernel: tpu_custom_call.1
$region0: #{tpu_custom_call.1}
  #allocation0 [shape = 'u32[]', space=smem, size = 0x4, offset = 0x4, fixed_abs, tag = 'smem constant byte address 0x4 - core index']
  #allocation1 [shape = 'u32[144,128]{1,0:T(1,128)}', space=vmem, size = 0x12000, scoped, tag = 'internal scratch']
  %s0 = inlined_call_operand.hbm [shape: f32[16,128], index: 0, kind: input, shape index: {}]
  %s1 = inlined_call_operand.hbm [shape: f32[8,16], index: 1, kind: input, shape index: {}]
  %s2 = inlined_call_operand.hbm [shape: f32[5,8,128], index: 2, kind: output, shape index: {}]
  %s3 = sld [smem:[#allocation0]]
  $region30: #{tpu_custom_call.1} parent=0
    _
  %s5 = ssub.s32 1, %s3
  %s6 = scalar_select 0, %s5, %s3
  $region1: #{tpu_custom_call.1} parent=0
    #allocation2 [shape = 'u8[8192]{0}', space=vmem, size = 0x2000, scoped, tag = 'input window, operand 0, single buffered']
    #allocation3 [shape = 's32[1]{0}', space=sflag, size = 0x4, scoped, tag = 'scoped memory for tpu_custom_call.1']
    #allocation4 [shape = 's32[1]{0}', space=sflag, size = 0x4, scoped, tag = 'scoped memory for tpu_custom_call.1']
    #allocation5 [shape = 'u8[4096]{0}', space=vmem, size = 0x1000, scoped, tag = 'input window, operand 1, single buffered']
    #allocation6 [shape = 's32[1]{0}', space=sflag, size = 0x4, scoped, tag = 'scoped memory for tpu_custom_call.1']
    #allocation7 [shape = 'u8[20480]{0}', space=vmem, size = 0x5000, scoped, tag = 'output window, operand 0, single buffered']
    %7 = vsyncpa [#allocation3], 0
    %8 = vsyncpa [#allocation6], 0
    %9 = vsyncpa [#allocation4], 0
    // Predicated region
    $region2: #{tpu_custom_call.1} parent=1 // pred_check
      _
    $region3: #{tpu_custom_call.1} parent=1 // pred_check_branch
      %11 = sbr.rel (0) target = $region5
    $region4: #{tpu_custom_call.1} parent=1 // pred_region
      %s12 = sadd.s32 0, 0
      %s14 = ssub.s32 256, 256
      %15 = vsyncadd [#allocation3], %s14
      %s16 = smul.addr %s12, 128
      %s17 = scalar_lea.hbm %s0, %s16
      %s18 = sshll.u32 [#allocation2], 4
      %s19 = int_to_ptr.vmem [resolvable:$true] %s18
      %24 = dma.hbm_to_vmem [thread:$0]  %s17, 256, %s19, [#allocation3], 128, 128, 8
    $region5: #{tpu_custom_call.1} parent=1 // pred_fallthru
      _
    // Predicated region
    $region6: #{tpu_custom_call.1} parent=1 // pred_check
      _
    $region7: #{tpu_custom_call.1} parent=1 // pred_check_branch
      %26 = sbr.rel (0) target = $region9
    $region8: #{tpu_custom_call.1} parent=1 // pred_region
      %s28 = ssub.s32 128, 128
      %29 = vsyncadd [#allocation6], %s28
      %s31 = sshll.u32 [#allocation5], 4
      %s32 = int_to_ptr.vmem [resolvable:$true] %s31
      %34 = dma.hbm_to_vmem [thread:$0]  %s1, 128, %s32, [#allocation6]
    $region9: #{tpu_custom_call.1} parent=1 // pred_fallthru
      _
    // Predicated region
    $region10: #{tpu_custom_call.1} parent=1 // pred_check
      _
    $region11: #{tpu_custom_call.1} parent=1 // pred_check_branch
      %36 = sbr.rel (0) target = $region13
    $region12: #{tpu_custom_call.1} parent=1 // pred_region
      %37 = dma.done [#allocation3], 256
    $region13: #{tpu_custom_call.1} parent=1 // pred_fallthru
      _
    // Predicated region
    $region14: #{tpu_custom_call.1} parent=1 // pred_check
      _
    $region15: #{tpu_custom_call.1} parent=1 // pred_check_branch
      %39 = sbr.rel (0) target = $region17
    $region16: #{tpu_custom_call.1} parent=1 // pred_region
      %40 = dma.done [#allocation6], 128
    $region17: #{tpu_custom_call.1} parent=1 // pred_fallthru
      _
    %s41 = sadd.s32 0, 0
    %p42 = scmp.eq.s32.totalorder 0, 0
    // Predicated region
    $region18: #{tpu_custom_call.1} parent=1 // pred_check
      %p43 = pneg %p42
    $region19: #{tpu_custom_call.1} parent=1 // pred_check_branch
      %45 = sbr.rel (%p43) target = $region21
    $region20: #{tpu_custom_call.1} parent=1 // pred_region
      %46 = vst [vmem:[#allocation7] sm:$0xff] 0.0
      %47 = vst [vmem:[#allocation7 + $0x8] sm:$0xff] 0.0
      %48 = vst [vmem:[#allocation7 + $0x10] sm:$0xff] 0.0
      %49 = vst [vmem:[#allocation7 + $0x18] sm:$0xff] 0.0
      %50 = vst [vmem:[#allocation7 + $0x20] sm:$0xff] 0.0
    $region21: #{tpu_custom_call.1} parent=1 // pred_fallthru
      _
    %v51 = vld [vmem:[#allocation5] sm:$0xff]
    %53 = vset.pattern.permute.xlu0 0
    %54 = vperm.xlu0 %53, %v51
    %v55 = vpop.permute.xlu0 %54
    %57 = vset.pattern.permute.xlu0 1
    %58 = vperm.xlu0 %57, %v51
    %v59 = vpop.permute.xlu0 %58
    %61 = vset.pattern.permute.xlu0 2
    %62 = vperm.xlu0 %61, %v51
    %v63 = vpop.permute.xlu0 %62
    %65 = vset.pattern.permute.xlu0 3
    %66 = vperm.xlu0 %65, %v51
    %v67 = vpop.permute.xlu0 %66
    %69 = vset.pattern.permute.xlu0 4
    %70 = vperm.xlu0 %69, %v51
    %v71 = vpop.permute.xlu0 %70
    %73 = vset.pattern.permute.xlu0 5
    %74 = vperm.xlu0 %73, %v51
    %v75 = vpop.permute.xlu0 %74
    %77 = vset.pattern.permute.xlu0 6
    %78 = vperm.xlu0 %77, %v51
    %v79 = vpop.permute.xlu0 %78
    %81 = vset.pattern.permute.xlu0 7
    %82 = vperm.xlu0 %81, %v51
    %v83 = vpop.permute.xlu0 %82
    %85 = vset.pattern.permute.xlu0 8
    %86 = vperm.xlu0 %85, %v51
    %v87 = vpop.permute.xlu0 %86
    %89 = vrot.lane.b32.xlu0 %v51, 2
    %v90 = vpop.permute.xlu0 %89
    %v92 = vsub.f32 %v51, %v90
    %v93 = vadd.f32 %v92, 1.0
    %95 = vrot.lane.b32.xlu0 %v93, 127
    %v96 = vpop.permute.xlu0 %95
    %v98 = vmul.f32 %v93, %v96
    %100 = vset.pattern.permute.xlu0 7
    %101 = vperm.xlu0 %100, %v98
    %v102 = vpop.permute.xlu0 %101
    %v104 = vld [vmem:[#allocation2 + $0x5] sm:$0x1]
    %v105 = vlaneseq
    %v106 = vshrl.u32 %v105, 7
    %v107 = vsub.s32 0, %v106
    %v108 = vrot.slane %v104, %v107
    %v109 = vld [vmem:[#allocation2 + $0x6] sm:$0x1]
    %v110 = vlaneseq
    %v111 = vshrl.u32 %v110, 7
    %v112 = vsub.s32 0, %v111
    %v113 = vrot.slane %v109, %v112
    %v114 = vld [vmem:[#allocation2 + $0x7] sm:$0x1]
    %v115 = vlaneseq
    %v116 = vshrl.u32 %v115, 7
    %v117 = vsub.s32 0, %v116
    %v118 = vrot.slane %v114, %v117
    %v119 = vld [vmem:[#allocation2 + $0x8] sm:$0x1]
    %v120 = vlaneseq
    %v121 = vshrl.u32 %v120, 7
    %v122 = vsub.s32 0, %v121
    %v123 = vrot.slane %v119, %v122
    %v124 = vmin.f32 %v118, %v83
    %v125 = vmax.f32 %v108, %v75
    %v126 = vsub.f32 %v124, %v125
    %v127 = vadd.f32 %v126, 1.0
    %v128 = vmax.f32 %v127, 0.0
    %v129 = vmin.f32 %v123, %v87
    %v130 = vmax.f32 %v113, %v79
    %v131 = vsub.f32 %v129, %v130
    %v132 = vadd.f32 %v131, 1.0
    %v133 = vmax.f32 %v132, 0.0
    %v134 = vmul.f32 %v128, %v133
    %v135 = vsub.f32 %v118, %v108
    %v136 = vadd.f32 %v135, 1.0
    %v137 = vsub.f32 %v123, %v113
    %v138 = vadd.f32 %v137, 1.0
    %v139 = vmul.f32 %v136, %v138
    %v140 = vadd.f32 %v139, %v102
    %v141 = vsub.f32 %v140, %v134
    %v142 = vrcp.pop %v141
    %v143 = vmul.f32 %v134, %v142
    %vm144 = vcmp.gt.f32.partialorder %v134, 0.0
    %v145 = vsel %vm144, %v143, 1.0
    %v146 = vlog2.pop %v145
    %v147 = vmul.f32 %v146, 0.6931472
    %v148 = vsub.f32 0.0, %v147
    %v149 = vsel %vm144, %v148, 0.0
    %v150 = vld [vmem:[#allocation2] sm:$0x1]
    %v151 = vlaneseq
    %v152 = vshrl.u32 %v151, 7
    %v153 = vsub.s32 0, %v152
    %v154 = vrot.slane %v150, %v153
    %v155 = vsub.f32 %v55, %v154
    %v156 = vand.u32 2147483647, %v155
    %vm157 = vcmp.lt.f32.partialorder %v156, 1.0
    %v158 = vmul.f32 %v156, 0.5
    %v159 = vmul.f32 %v158, %v156
    %v160 = vsub.f32 %v156, 0.5
    %v161 = vsel %vm157, %v159, %v160
    %v162 = vmul.f32 %v161, %v161
    %v163 = vld [vmem:[#allocation2 + $0x1] sm:$0x1]
    %v164 = vlaneseq
    %v165 = vshrl.u32 %v164, 7
    %v166 = vsub.s32 0, %v165
    %v167 = vrot.slane %v163, %v166
    %v168 = vsub.f32 %v59, %v167
    %v169 = vand.u32 2147483647, %v168
    %vm170 = vcmp.lt.f32.partialorder %v169, 1.0
    %v171 = vmul.f32 %v169, 0.5
    %v172 = vmul.f32 %v171, %v169
    %v173 = vsub.f32 %v169, 0.5
    %v174 = vsel %vm170, %v172, %v173
    %v175 = vmul.f32 %v174, %v174
    %v176 = vadd.f32 %v162, %v175
    %v177 = vld [vmem:[#allocation2 + $0x2] sm:$0x1]
    %v178 = vlaneseq
    %v179 = vshrl.u32 %v178, 7
    %v180 = vsub.s32 0, %v179
    %v181 = vrot.slane %v177, %v180
    %v182 = vsub.f32 %v63, %v181
    %v183 = vand.u32 2147483647, %v182
    %vm184 = vcmp.lt.f32.partialorder %v183, 1.0
    %v185 = vmul.f32 %v183, 0.5
    %v186 = vmul.f32 %v185, %v183
    %v187 = vsub.f32 %v183, 0.5
    %v188 = vsel %vm184, %v186, %v187
    %v189 = vmul.f32 %v188, %v188
    %v190 = vadd.f32 %v176, %v189
    %v191 = vld [vmem:[#allocation2 + $0x3] sm:$0x1]
    %v192 = vlaneseq
    %v193 = vshrl.u32 %v192, 7
    %v194 = vsub.s32 0, %v193
    %v195 = vrot.slane %v191, %v194
    %v196 = vsub.f32 %v67, %v195
    %v197 = vand.u32 2147483647, %v196
    %vm198 = vcmp.lt.f32.partialorder %v197, 1.0
    %v199 = vmul.f32 %v197, 0.5
    %v200 = vmul.f32 %v199, %v197
    %v201 = vsub.f32 %v197, 0.5
    %v202 = vsel %vm198, %v200, %v201
    %v203 = vmul.f32 %v202, %v202
    %v204 = vadd.f32 %v190, %v203
    %v205 = vld [vmem:[#allocation2 + $0x4] sm:$0x1]
    %v206 = vlaneseq
    %v207 = vshrl.u32 %v206, 7
    %v208 = vsub.s32 0, %v207
    %v209 = vrot.slane %v205, %v208
    %v210 = vsub.f32 %v71, %v209
    %v211 = vand.u32 2147483647, %v210
    %vm212 = vcmp.lt.f32.partialorder %v211, 1.0
    %v213 = vmul.f32 %v211, 0.5
    %v214 = vmul.f32 %v213, %v211
    %v215 = vsub.f32 %v211, 0.5
    %v216 = vsel %vm212, %v214, %v215
    %v217 = vmul.f32 %v216, %v216
    %v218 = vadd.f32 %v204, %v217
    %vm219 = vcmp.gt.f32.partialorder %v218, 0.0
    %v220 = vrsqrt.pop %v218
    %v221 = vmul.f32 %v149, %v220
    %v222 = vsel %vm219, %v221, 0.0
    %v223 = vmul.f32 %v161, %v222
    %v224 = vadd.f32 %v223, 0.0
    %v225 = vmul.f32 %v174, %v222
    %v226 = vadd.f32 %v225, 0.0
    %v227 = vmul.f32 %v188, %v222
    %v228 = vadd.f32 %v227, 0.0
    %v229 = vmul.f32 %v202, %v222
    %v230 = vadd.f32 %v229, 0.0
    %v231 = vmul.f32 %v216, %v222
    %v232 = vadd.f32 %v231, 0.0
    %v233 = vld [vmem:[#allocation7] sm:$0xff]
    %v234 = vadd.f32 %v233, %v224
    %235 = vst [vmem:[#allocation7] sm:$0xff] %v234
    %s236 = scalar_lea.vmem [#allocation7], 8
    %v237 = vld [vmem:[%s236] sm:$0xff]
    %v238 = vadd.f32 %v237, %v226
    %239 = vst [vmem:[%s236] sm:$0xff] %v238
    %s240 = scalar_lea.vmem [#allocation7], 16
    %v241 = vld [vmem:[%s240] sm:$0xff]
    %v242 = vadd.f32 %v241, %v228
    %243 = vst [vmem:[%s240] sm:$0xff] %v242
    %s244 = scalar_lea.vmem [#allocation7], 24
    %v245 = vld [vmem:[%s244] sm:$0xff]
    %v246 = vadd.f32 %v245, %v230
    %247 = vst [vmem:[%s244] sm:$0xff] %v246
    %s248 = scalar_lea.vmem [#allocation7], 32
    %v249 = vld [vmem:[%s248] sm:$0xff]
    %v250 = vadd.f32 %v249, %v232
    %251 = vst [vmem:[%s248] sm:$0xff] %v250
    // Predicated region
    $region22: #{tpu_custom_call.1} parent=1 // pred_check
      _
    $region23: #{tpu_custom_call.1} parent=1 // pred_check_branch
      %253 = sbr.rel (0) target = $region25
    $region24: #{tpu_custom_call.1} parent=1 // pred_region
      %s255 = ssub.s32 640, 640
      %256 = vsyncadd [#allocation4], %s255
      %s257 = sshll.u32 [#allocation7], 4
      %s258 = int_to_ptr.vmem [resolvable:$true] %s257
      %263 = dma.vmem_to_hbm [thread:$0]  %s258, 640, %s2, [#allocation4], 128, 128, 8
    $region25: #{tpu_custom_call.1} parent=1 // pred_fallthru
      _
    // Predicated region
    $region26: #{tpu_custom_call.1} parent=1 // pred_check
      _
    $region27: #{tpu_custom_call.1} parent=1 // pred_check_branch
      %265 = sbr.rel (0) target = $region29
    $region28: #{tpu_custom_call.1} parent=1 // pred_region
      %266 = dma.done [#allocation4], 640
    $region29: #{tpu_custom_call.1} parent=1 // pred_fallthru
      _
    %267 = vsyncpa [#allocation3], 1
    %268 = vsyncpa [#allocation6], 1
    %269 = vsyncpa [#allocation4], 1

</llo_original>
